<compile_context>
chip_gen: v6e
topology: v6e:2x2x1
jax: 0.10.0
libtpu: 0.0.40
codegen_flags: <defaults>
</compile_context>

<pallas_src>
import functools
import math

import jax
import jax.numpy as jnp
from jax.experimental import pallas as pl
from jax.experimental.pallas import tpu as pltpu


def _weight_pool_kernel(x_ref, w1t_ref, w2_ref, out_ref, *, batch, channels, seq):
    # x_ref:   (B*C*S, DIN)   rows ordered (b, c, s) -- free reshape of the input
    # w1t_ref: (SIZE, DIN)    w1 transposed (tiny, done in the jitted wrapper)
    # w2_ref:  (SIZE, DM*DIN) w2 flattened over its last two dims
    # out_ref: (B*S, DM*DIN)  lane-dense output, rows ordered (b, s)
    x = x_ref[...]
    w1t = w1t_ref[...]

    # logits_t[k, r] = sum_d x[r, d] * w1[d, k] -- one flattened MXU op whose
    # result is a single lane-dense (SIZE, B*C*S) tile (one f32 vreg here).
    logits_t = jax.lax.dot_general(
        w1t, x, (((1,), (1,)), ((), ())),
        preferred_element_type=jnp.float32)                   # (SIZE, B*C*S)

    # Softmax over SIZE (the sublane axis) == torch.softmax(dim=-1), in f32.
    m = jnp.max(logits_t, axis=0, keepdims=True)              # (1, B*C*S)
    e = jnp.exp(logits_t - m)
    denom = jnp.sum(e, axis=0, keepdims=True)                 # (1, B*C*S)
    sim_t = e * pl.reciprocal(denom)                          # (SIZE, B*C*S)

    # einsum('bcsk,kdt->bsdt') is linear in sim, so reduce over channels first.
    # Columns are ordered (b, c, s): sum the C lane-slices of each batch block
    # with static slices and (C-1) VPU adds per batch ("strided adds").
    parts = []
    for b in range(batch):
        base = b * channels * seq
        acc = sim_t[:, base:base + seq]
        for c in range(1, channels):
            acc = acc + sim_t[:, base + c * seq: base + (c + 1) * seq]
        parts.append(acc)
    sim_sum_t = parts[0] if batch == 1 else jnp.concatenate(parts, axis=1)  # (SIZE, B*S)

    # Contract SIZE (dim 0 of both operands) -> lane-dense (B*S, DM*DIN) output.
    out = jax.lax.dot_general(
        sim_sum_t, w2_ref[...], (((0,), (0,)), ((), ())),
        preferred_element_type=jnp.float32)                   # (B*S, DM*DIN)
    out_ref[...] = out.astype(out_ref.dtype)


@jax.jit
def weight_pool_forward(x, w1, w2, bias):
    """x: (B, C, S, input_dim) -> (weight (B, S, d_model, input_dim), bias)."""
    B, C, S, DIN = x.shape
    SIZE = w1.shape[1]
    DM = w2.shape[1]
    assert w1.shape == (DIN, SIZE)
    assert w2.shape == (SIZE, DM, DIN)
    BS = B * S
    BCS = B * C * S

    # Free, contiguous reshapes and a 512 B transpose -- all fused under jit,
    # no HLO copy of x feeding the custom call.
    x_flat = x.reshape(BCS, DIN)
    w1_t = jnp.transpose(w1)                  # (SIZE, DIN)
    w2_2d = w2.reshape(SIZE, DM * DIN)

    itemsize = jnp.dtype(x.dtype).itemsize
    cost = pl.CostEstimate(
        flops=2 * BCS * DIN * SIZE + 2 * BS * SIZE * DM * DIN,
        transcendentals=BCS * SIZE,
        bytes_accessed=(x_flat.size + w1_t.size + w2_2d.size) * itemsize
                       + BS * DM * DIN * 4,
    )

    out = pl.pallas_call(
        functools.partial(_weight_pool_kernel, batch=B, channels=C, seq=S),
        out_shape=jax.ShapeDtypeStruct((BS, DM * DIN), jnp.float32),
        in_specs=[
            pl.BlockSpec(memory_space=pltpu.MemorySpace.VMEM),
            pl.BlockSpec(memory_space=pltpu.MemorySpace.VMEM),
            pl.BlockSpec(memory_space=pltpu.MemorySpace.VMEM),
        ],
        out_specs=pl.BlockSpec(memory_space=pltpu.MemorySpace.VMEM),
        cost_estimate=cost,
    )(x_flat, w1_t, w2_2d)

    weight = out.reshape(B, S, DM, DIN)
    return weight, bias


def _xavier_uniform(key, shape, fan_in, fan_out, dtype=jnp.float32):
    a = math.sqrt(6.0 / (fan_in + fan_out))
    return jax.random.uniform(key, shape, dtype=dtype, minval=-a, maxval=a)


def _reference_forward(x, w1, w2, bias):
    # Pure-JAX reference mirroring the PyTorch module ('attn' method, 4-D input).
    sim = jax.nn.softmax(jnp.einsum('bcsd,dk->bcsk', x, w1), axis=-1)
    weight = jnp.einsum('bcsk,kdt->bsdt', sim, w2)
    return weight, bias


if __name__ == "__main__":
    # Small shapes consistent with the module.
    B, C = 2, 4
    NUM_PATCHES = 16     # S
    INPUT_DIM = 16
    SIZE = 8
    D_MODEL = 32

    key = jax.random.PRNGKey(0)
    kx, k1, k2, kb = jax.random.split(key, 4)

    x = jax.random.normal(kx, (B, C, NUM_PATCHES, INPUT_DIM), dtype=jnp.float32)

    # Deterministic xavier-uniform parameter init (shapes from __init__).
    w1 = _xavier_uniform(k1, (INPUT_DIM, SIZE), fan_in=SIZE, fan_out=INPUT_DIM)
    # torch xavier on (size, d_model, input_dim): fan_in=d_model*input_dim, fan_out=size*input_dim
    w2 = _xavier_uniform(k2, (SIZE, D_MODEL, INPUT_DIM),
                         fan_in=D_MODEL * INPUT_DIM, fan_out=SIZE * INPUT_DIM)
    bias = _xavier_uniform(kb, (NUM_PATCHES, D_MODEL),
                           fan_in=D_MODEL, fan_out=NUM_PATCHES)

    weight, bias_out = weight_pool_forward(x, w1, w2, bias)
    jax.block_until_ready(weight)
    jax.block_until_ready(bias_out)

    ref_weight, ref_bias = _reference_forward(x, w1, w2, bias)
    assert weight.shape == (B, NUM_PATCHES, D_MODEL, INPUT_DIM)
    assert bias_out.shape == (NUM_PATCHES, D_MODEL)
    assert jnp.allclose(weight, ref_weight, atol=1e-5, rtol=1e-5)
    assert jnp.allclose(bias_out, ref_bias)

    print("KERNEL_OK")
</pallas_src>

<mosaic_0001>
module attributes {stable_mosaic.version = 11 : i64} {
  func.func @_weight_pool_kernel(%arg0: memref<128x16xf32, #tpu.memory_space<vmem>>, %arg1: memref<8x16xf32, #tpu.memory_space<vmem>>, %arg2: memref<8x512xf32, #tpu.memory_space<vmem>>, %arg3: memref<32x512xf32, #tpu.memory_space<vmem>>) attributes {dimension_semantics = [], scalar_prefetch = 0 : i64, scratch_operands = 0 : i64, tpu.core_type = #tpu.core_type<tc>} {
    %c0 = arith.constant 0 : index
    %c0_0 = arith.constant 0 : index
    %0 = vector.load %arg0[%c0, %c0_0] : memref<128x16xf32, #tpu.memory_space<vmem>>, vector<128x16xf32>
    %c0_1 = arith.constant 0 : index
    %c0_2 = arith.constant 0 : index
    %1 = vector.load %arg1[%c0_1, %c0_2] : memref<8x16xf32, #tpu.memory_space<vmem>>, vector<8x16xf32>
    %cst = arith.constant dense<0.000000e+00> : vector<8x128xf32>
    %2 = tpu.matmul %1, %0, %cst {dimension_numbers = #tpu.dot_dimension_numbers<[1], [1], [0], [0], [0, 0, 1, 0], [], []>} : vector<8x16xf32>, vector<128x16xf32>, vector<8x128xf32> -> vector<8x128xf32>
    %cst_3 = arith.constant dense<0xFF800000> : vector<128xf32>
    %3 = vector.multi_reduction <maximumf>, %2, %cst_3 [0] : vector<8x128xf32> to vector<128xf32>
    %4 = vector.shape_cast %3 : vector<128xf32> to vector<1x128xf32>
    %5 = vector.broadcast %4 : vector<1x128xf32> to vector<8x128xf32>
    %6 = arith.subf %2, %5 : vector<8x128xf32>
    %7 = math.exp %6 : vector<8x128xf32>
    %cst_4 = arith.constant dense<0.000000e+00> : vector<128xf32>
    %8 = vector.multi_reduction <add>, %7, %cst_4 [0] : vector<8x128xf32> to vector<128xf32>
    %9 = vector.shape_cast %8 : vector<128xf32> to vector<1x128xf32>
    %10 = tpu.reciprocal %9 : vector<1x128xf32> -> vector<1x128xf32>
    %11 = vector.broadcast %10 : vector<1x128xf32> to vector<8x128xf32>
    %12 = arith.mulf %7, %11 : vector<8x128xf32>
    %13 = vector.extract_strided_slice %12 {offsets = [0, 0], sizes = [8, 16], strides = [1, 1]} : vector<8x128xf32> to vector<8x16xf32>
    %14 = vector.extract_strided_slice %12 {offsets = [0, 16], sizes = [8, 16], strides = [1, 1]} : vector<8x128xf32> to vector<8x16xf32>
    %15 = arith.addf %13, %14 : vector<8x16xf32>
    %16 = vector.extract_strided_slice %12 {offsets = [0, 32], sizes = [8, 16], strides = [1, 1]} : vector<8x128xf32> to vector<8x16xf32>
    %17 = arith.addf %15, %16 : vector<8x16xf32>
    %18 = vector.extract_strided_slice %12 {offsets = [0, 48], sizes = [8, 16], strides = [1, 1]} : vector<8x128xf32> to vector<8x16xf32>
    %19 = arith.addf %17, %18 : vector<8x16xf32>
    %20 = vector.extract_strided_slice %12 {offsets = [0, 64], sizes = [8, 16], strides = [1, 1]} : vector<8x128xf32> to vector<8x16xf32>
    %21 = vector.extract_strided_slice %12 {offsets = [0, 80], sizes = [8, 16], strides = [1, 1]} : vector<8x128xf32> to vector<8x16xf32>
    %22 = arith.addf %20, %21 : vector<8x16xf32>
    %23 = vector.extract_strided_slice %12 {offsets = [0, 96], sizes = [8, 16], strides = [1, 1]} : vector<8x128xf32> to vector<8x16xf32>
    %24 = arith.addf %22, %23 : vector<8x16xf32>
    %25 = vector.extract_strided_slice %12 {offsets = [0, 112], sizes = [8, 16], strides = [1, 1]} : vector<8x128xf32> to vector<8x16xf32>
    %26 = arith.addf %24, %25 : vector<8x16xf32>
    %27 = tpu.concatenate %19, %26 in 1 : vector<8x16xf32>, vector<8x16xf32> -> vector<8x32xf32>
    %c0_5 = arith.constant 0 : index
    %c0_6 = arith.constant 0 : index
    %28 = vector.load %arg2[%c0_5, %c0_6] : memref<8x512xf32, #tpu.memory_space<vmem>>, vector<8x512xf32>
    %cst_7 = arith.constant dense<0.000000e+00> : vector<32x512xf32>
    %29 = tpu.matmul %27, %28, %cst_7 {dimension_numbers = #tpu.dot_dimension_numbers<[0], [0], [1], [1], [0, 1, 1, 1], [], []>} : vector<8x32xf32>, vector<8x512xf32>, vector<32x512xf32> -> vector<32x512xf32>
    %c0_8 = arith.constant 0 : index
    %c0_9 = arith.constant 0 : index
    %30 = vector.load %arg3[%c0_8, %c0_9] : memref<32x512xf32, #tpu.memory_space<vmem>>, vector<32x512xf32>
    tpu.vector_store %arg3[%c0_8, %c0_9], %29 {strides = array<i32>} : memref<32x512xf32, #tpu.memory_space<vmem>>, vector<32x512xf32>,
    return
  }
}

</mosaic_0001>

<llo_original>
// kernel: weight_pool_forward.1
$region0: #{weight_pool_forward.1}
  #allocation0 [shape = 'u32[]', space=smem, size = 0x4, offset = 0x4, fixed_abs, tag = 'smem constant byte address 0x4 - core index']
  #allocation1 [shape = 'u32[144,128]{1,0:T(1,128)}', space=vmem, size = 0x12000, scoped, tag = 'internal scratch']
  %s0 = inlined_call_operand.vmem [shape: f32[128,16], index: 0, kind: input, shape index: {}]
  %s1 = inlined_call_operand.vmem [shape: f32[8,16], index: 1, kind: input, shape index: {}]
  %s2 = inlined_call_operand.vmem [shape: f32[8,512], index: 2, kind: input, shape index: {}]
  %s3 = inlined_call_operand.vmem [shape: f32[32,512], index: 3, kind: output, shape index: {}]
  %s4 = sld [smem:[#allocation0]]
  $region22: #{weight_pool_forward.1} parent=0
    _
  %s6 = ssub.s32 1, %s4
  %s7 = scalar_select 0, %s6, %s4
  // Predicated region
  $region2: #{weight_pool_forward.1} parent=0 // pred_check
    _
  $region3: #{weight_pool_forward.1} parent=0 // pred_check_branch
    %9 = sbr.rel (0) target = $region5
  $region4: #{weight_pool_forward.1} parent=0 // pred_region
    _
  $region5: #{weight_pool_forward.1} parent=0 // pred_fallthru
    _
  // Predicated region
  $region6: #{weight_pool_forward.1} parent=0 // pred_check
    _
  $region7: #{weight_pool_forward.1} parent=0 // pred_check_branch
    %11 = sbr.rel (0) target = $region9
  $region8: #{weight_pool_forward.1} parent=0 // pred_region
    _
  $region9: #{weight_pool_forward.1} parent=0 // pred_fallthru
    _
  // Predicated region
  $region10: #{weight_pool_forward.1} parent=0 // pred_check
    _
  $region11: #{weight_pool_forward.1} parent=0 // pred_check_branch
    %13 = sbr.rel (0) target = $region13
  $region12: #{weight_pool_forward.1} parent=0 // pred_region
    _
  $region13: #{weight_pool_forward.1} parent=0 // pred_fallthru
    _
  %v14 = vld [vmem:[%s0] sm:$0xff]
  %v15 = vld [vmem:[%s0 + $0x8] sm:$0xff]
  %v16 = vld [vmem:[%s0 + $0x10] sm:$0xff]
  %v17 = vld [vmem:[%s0 + $0x18] sm:$0xff]
  %v18 = vld [vmem:[%s0 + $0x20] sm:$0xff]
  %v19 = vld [vmem:[%s0 + $0x28] sm:$0xff]
  %v20 = vld [vmem:[%s0 + $0x30] sm:$0xff]
  %v21 = vld [vmem:[%s0 + $0x38] sm:$0xff]
  %v22 = vld [vmem:[%s0 + $0x40] sm:$0xff]
  %v23 = vld [vmem:[%s0 + $0x48] sm:$0xff]
  %v24 = vld [vmem:[%s0 + $0x50] sm:$0xff]
  %v25 = vld [vmem:[%s0 + $0x58] sm:$0xff]
  %v26 = vld [vmem:[%s0 + $0x60] sm:$0xff]
  %v27 = vld [vmem:[%s0 + $0x68] sm:$0xff]
  %v28 = vld [vmem:[%s0 + $0x70] sm:$0xff]
  %v29 = vld [vmem:[%s0 + $0x78] sm:$0xff]
  %v30 = vld [vmem:[%s1] sm:$0xff]
  %vm31 = vcmask 130048
  %v33 = vsel %vm31, %v30, 0
  %v36 = vsel %vm31, %v14, 0
  %v39 = vsel %vm31, %v15, 0
  %v42 = vsel %vm31, %v16, 0
  %v45 = vsel %vm31, %v17, 0
  %v48 = vsel %vm31, %v18, 0
  %v51 = vsel %vm31, %v19, 0
  %v54 = vsel %vm31, %v20, 0
  %v57 = vsel %vm31, %v21, 0
  %v60 = vsel %vm31, %v22, 0
  %v63 = vsel %vm31, %v23, 0
  %v66 = vsel %vm31, %v24, 0
  %v69 = vsel %vm31, %v25, 0
  %v72 = vsel %vm31, %v26, 0
  %v75 = vsel %vm31, %v27, 0
  %v78 = vsel %vm31, %v28, 0
  %v81 = vsel %vm31, %v29, 0
  %83 = vmatprep.subr.mxu0 0.0
  %84 = vmatpush1.xpose.msra.mxu0 %v81
  %85 = vmatprep.subr.mxu0 0.0
  %86 = vmatpush1.xpose.msra.mxu0 %v78
  %87 = vmatprep.subr.mxu0 0.0
  %88 = vmatpush1.xpose.msra.mxu0 %v75
  %89 = vmatprep.subr.mxu0 0.0
  %90 = vmatpush1.xpose.msra.mxu0 %v72
  %91 = vmatprep.subr.mxu0 0.0
  %92 = vmatpush1.xpose.msra.mxu0 %v69
  %93 = vmatprep.subr.mxu0 0.0
  %94 = vmatpush1.xpose.msra.mxu0 %v66
  %95 = vmatprep.subr.mxu0 0.0
  %96 = vmatpush1.xpose.msra.mxu0 %v63
  %97 = vmatprep.subr.mxu0 0.0
  %98 = vmatpush1.xpose.msra.mxu0 %v60
  %99 = vmatprep.subr.mxu0 0.0
  %100 = vmatpush1.xpose.msra.mxu0 %v57
  %101 = vmatprep.subr.mxu0 0.0
  %102 = vmatpush1.xpose.msra.mxu0 %v54
  %103 = vmatprep.subr.mxu0 0.0
  %104 = vmatpush1.xpose.msra.mxu0 %v51
  %105 = vmatprep.subr.mxu0 0.0
  %106 = vmatpush1.xpose.msra.mxu0 %v48
  %107 = vmatprep.subr.mxu0 0.0
  %108 = vmatpush1.xpose.msra.mxu0 %v45
  %109 = vmatprep.subr.mxu0 0.0
  %110 = vmatpush1.xpose.msra.mxu0 %v42
  %111 = vmatprep.subr.mxu0 0.0
  %112 = vmatpush1.xpose.msra.mxu0 %v39
  %113 = vmatprep.subr.mxu0 0.0
  %114 = vmatpush1.xpose.msra.mxu0 %v36
  %115 = vmatprep.subr.mxu0 0.0
  %116 = vmatpush2.xpose.msra.mxu0 0.0
  %117 = vmatprep.subr.mxu0 0.0
  %118 = vmatpush2.xpose.msra.mxu0 0.0
  %119 = vmatprep.subr.mxu0 0.0
  %120 = vmatpush2.xpose.msra.mxu0 0.0
  %121 = vmatprep.subr.mxu0 0.0
  %122 = vmatpush2.xpose.msra.mxu0 0.0
  %123 = vmatprep.subr.mxu0 0.0
  %124 = vmatpush2.xpose.msra.mxu0 0.0
  %125 = vmatprep.subr.mxu0 0.0
  %126 = vmatpush2.xpose.msra.mxu0 0.0
  %127 = vmatprep.subr.mxu0 0.0
  %128 = vmatpush2.xpose.msra.mxu0 0.0
  %129 = vmatprep.subr.mxu0 0.0
  %130 = vmatpush2.xpose.msra.mxu0 0.0
  %131 = vmatprep.subr.mxu0 0.0
  %132 = vmatpush2.xpose.msra.mxu0 0.0
  %133 = vmatprep.subr.mxu0 0.0
  %134 = vmatpush2.xpose.msra.mxu0 0.0
  %135 = vmatprep.subr.mxu0 0.0
  %136 = vmatpush2.xpose.msra.mxu0 0.0
  %137 = vmatprep.subr.mxu0 0.0
  %138 = vmatpush2.xpose.msra.mxu0 0.0
  %139 = vmatprep.subr.mxu0 0.0
  %140 = vmatpush2.xpose.msra.mxu0 0.0
  %141 = vmatprep.subr.mxu0 0.0
  %142 = vmatpush2.xpose.msra.mxu0 0.0
  %143 = vmatprep.subr.mxu0 0.0
  %144 = vmatpush2.xpose.msra.mxu0 0.0
  %145 = vmatprep.subr.mxu0 0.0
  %146 = vmatpush2.xpose.msra.mxu0 0.0
  %147 = vmatprep.mubr.f32.mxu0 0.0
  %148 = vmatmul.mubr.f32.gmra.mxu0 %v33
  %v149 = vpop.f32.mrf.mxu0
  %v150 = vadd.f32 0.0, %v149
  %v151 = vpop.f32.mrf.mxu0
  %152 = vdwg.mxu0
  %v153 = vrot.slane %v150, 4
  %v154 = vmax.f32 %v150, %v153
  %v155 = vrot.slane %v154, 2
  %v156 = vmax.f32 %v154, %v155
  %v157 = vrot.slane %v156, 1
  %v158 = vmax.f32 %v156, %v157
  %v159 = vsub.f32 %v150, %v158
  %v160 = vmul.f32 %v159, 1.442695
  %v161 = vpow.pop %v160
  %v162 = vrot.slane %v161, 4
  %v163 = vadd.f32 %v161, %v162
  %v164 = vrot.slane %v163, 2
  %v165 = vadd.f32 %v163, %v164
  %v166 = vrot.slane %v165, 1
  %v167 = vadd.f32 %v165, %v166
  %v168 = vrcp.pop %v167
  %v169 = vmul.f32 %v161, %v168
  %171 = vrot.lane.b32.xlu0 %v169, 112
  %v172 = vpop.permute.xlu0 %171
  %v174 = vadd.f32 %v169, %v172
  %175 = vrot.lane.b32.xlu0 %v169, 96
  %v176 = vpop.permute.xlu0 %175
  %v178 = vadd.f32 %v174, %v176
  %179 = vrot.lane.b32.xlu0 %v169, 80
  %v180 = vpop.permute.xlu0 %179
  %v182 = vadd.f32 %v178, %v180
  %184 = vrot.lane.b32.xlu0 %v182, 80
  %v185 = vpop.permute.xlu0 %184
  %v187 = vsel %vm31, %v182, %v185
  %v188 = vld [vmem:[%s2] sm:$0xff]
  %v189 = vld [vmem:[%s2 + $0x8] sm:$0xff]
  %v190 = vld [vmem:[%s2 + $0x10] sm:$0xff]
  %v191 = vld [vmem:[%s2 + $0x18] sm:$0xff]
  %192 = vxpose.xlu0.b32.start [1/16] %v187, 128
  %193 = vxpose.xlu0.b32.cont [2/16] 0.0, 128
  %194 = vxpose.xlu0.b32.cont [3/16] 0.0, 128
  %195 = vxpose.xlu0.b32.cont [4/16] 0.0, 128
  %196 = vxpose.xlu0.b32.cont [5/16] 0.0, 128
  %197 = vxpose.xlu0.b32.cont [6/16] 0.0, 128
  %198 = vxpose.xlu0.b32.cont [7/16] 0.0, 128
  %199 = vxpose.xlu0.b32.cont [8/16] 0.0, 128
  %200 = vxpose.xlu0.b32.cont [9/16] 0.0, 128
  %201 = vxpose.xlu0.b32.cont [10/16] 0.0, 128
  %202 = vxpose.xlu0.b32.cont [11/16] 0.0, 128
  %203 = vxpose.xlu0.b32.cont [12/16] 0.0, 128
  %204 = vxpose.xlu0.b32.cont [13/16] 0.0, 128
  %205 = vxpose.xlu0.b32.cont [14/16] 0.0, 128
  %206 = vxpose.xlu0.b32.cont [15/16] 0.0, 128
  %207 = vxpose.xlu0.b32.end [16/16] 0.0, 128
  %v208 = vpop.trf.xlu0
  %v209 = vpop.trf.xlu0
  %v210 = vpop.trf.xlu0
  %v211 = vpop.trf.xlu0
  %v212 = vpop.trf.xlu0
  %v213 = vpop.trf.xlu0
  %v214 = vpop.trf.xlu0
  %v215 = vpop.trf.xlu0
  %v216 = vpop.trf.xlu0
  %v217 = vpop.trf.xlu0
  %v218 = vpop.trf.xlu0
  %v219 = vpop.trf.xlu0
  %v220 = vpop.trf.xlu0
  %v221 = vpop.trf.xlu0
  %v222 = vpop.trf.xlu0
  %v223 = vpop.trf.xlu0
  %vm224 = vcmask 64512
  %v226 = vsel %vm224, %v208, 0
  %v229 = vsel %vm224, %v209, 0
  %v232 = vsel %vm224, %v210, 0
  %v235 = vsel %vm224, %v211, 0
  %237 = vmatprep.subr.mxu0 0.0
  %238 = vmatpush1.msra.mxu0 0.0
  %239 = vmatprep.subr.mxu0 0.0
  %240 = vmatpush1.msra.mxu0 0.0
  %241 = vmatprep.subr.mxu0 0.0
  %242 = vmatpush1.msra.mxu0 0.0
  %243 = vmatprep.subr.mxu0 0.0
  %244 = vmatpush1.msra.mxu0 0.0
  %245 = vmatprep.subr.mxu0 0.0
  %246 = vmatpush1.msra.mxu0 0.0
  %247 = vmatprep.subr.mxu0 0.0
  %248 = vmatpush1.msra.mxu0 0.0
  %249 = vmatprep.subr.mxu0 0.0
  %250 = vmatpush1.msra.mxu0 0.0
  %251 = vmatprep.subr.mxu0 0.0
  %252 = vmatpush1.msra.mxu0 0.0
  %253 = vmatprep.subr.mxu0 0.0
  %254 = vmatpush1.msra.mxu0 0.0
  %255 = vmatprep.subr.mxu0 0.0
  %256 = vmatpush1.msra.mxu0 0.0
  %257 = vmatprep.subr.mxu0 0.0
  %258 = vmatpush1.msra.mxu0 0.0
  %259 = vmatprep.subr.mxu0 0.0
  %260 = vmatpush1.msra.mxu0 0.0
  %261 = vmatprep.subr.mxu0 0.0
  %262 = vmatpush1.msra.mxu0 0.0
  %263 = vmatprep.subr.mxu0 0.0
  %264 = vmatpush1.msra.mxu0 0.0
  %265 = vmatprep.subr.mxu0 0.0
  %266 = vmatpush1.msra.mxu0 0.0
  %267 = vmatprep.subr.mxu0 %v189
  %268 = vmatpush1.msra.mxu0 %v188
  %269 = vmatprep.subr.mxu0 0.0
  %270 = vmatpush2.msra.mxu0 0.0
  %271 = vmatprep.subr.mxu0 0.0
  %272 = vmatpush2.msra.mxu0 0.0
  %273 = vmatprep.subr.mxu0 0.0
  %274 = vmatpush2.msra.mxu0 0.0
  %275 = vmatprep.subr.mxu0 0.0
  %276 = vmatpush2.msra.mxu0 0.0
  %277 = vmatprep.subr.mxu0 0.0
  %278 = vmatpush2.msra.mxu0 0.0
  %279 = vmatprep.subr.mxu0 0.0
  %280 = vmatpush2.msra.mxu0 0.0
  %281 = vmatprep.subr.mxu0 0.0
  %282 = vmatpush2.msra.mxu0 0.0
  %283 = vmatprep.subr.mxu0 0.0
  %284 = vmatpush2.msra.mxu0 0.0
  %285 = vmatprep.subr.mxu0 0.0
  %286 = vmatpush2.msra.mxu0 0.0
  %287 = vmatprep.subr.mxu0 0.0
  %288 = vmatpush2.msra.mxu0 0.0
  %289 = vmatprep.subr.mxu0 0.0
  %290 = vmatpush2.msra.mxu0 0.0
  %291 = vmatprep.subr.mxu0 0.0
  %292 = vmatpush2.msra.mxu0 0.0
  %293 = vmatprep.subr.mxu0 0.0
  %294 = vmatpush2.msra.mxu0 0.0
  %295 = vmatprep.subr.mxu0 0.0
  %296 = vmatpush2.msra.mxu0 0.0
  %297 = vmatprep.subr.mxu0 0.0
  %298 = vmatpush2.msra.mxu0 0.0
  %299 = vmatprep.subr.mxu0 0.0
  %300 = vmatpush2.msra.mxu0 0.0
  %301 = vmatprep.mubr.f32.mxu0 0.0
  %302 = vmatmul.mubr.f32.gmra.mxu0 %v226
  %v303 = vpop.f32.mrf.mxu0
  %v304 = vadd.f32 0.0, %v303
  %v305 = vpop.f32.mrf.mxu0
  %v306 = vadd.f32 0.0, %v305
  %307 = vmatprep.mubr.f32.mxu0 0.0
  %308 = vmatmul.mubr.f32.gmra.mxu0 %v229
  %v309 = vpop.f32.mrf.mxu0
  %v310 = vadd.f32 0.0, %v309
  %v311 = vpop.f32.mrf.mxu0
  %v312 = vadd.f32 0.0, %v311
  %313 = vmatprep.mubr.f32.mxu0 0.0
  %314 = vmatmul.mubr.f32.gmra.mxu0 %v232
  %v315 = vpop.f32.mrf.mxu0
  %v316 = vadd.f32 0.0, %v315
  %v317 = vpop.f32.mrf.mxu0
  %v318 = vadd.f32 0.0, %v317
  %319 = vmatprep.mubr.f32.mxu0 0.0
  %320 = vmatmul.mubr.f32.gmra.mxu0 %v235
  %v321 = vpop.f32.mrf.mxu0
  %v322 = vadd.f32 0.0, %v321
  %v323 = vpop.f32.mrf.mxu0
  %v324 = vadd.f32 0.0, %v323
  %325 = vdwg.mxu0
  %326 = vmatprep.subr.mxu0 0.0
  %327 = vmatpush1.msra.mxu0 0.0
  %328 = vmatprep.subr.mxu0 0.0
  %329 = vmatpush1.msra.mxu0 0.0
  %330 = vmatprep.subr.mxu0 0.0
  %331 = vmatpush1.msra.mxu0 0.0
  %332 = vmatprep.subr.mxu0 0.0
  %333 = vmatpush1.msra.mxu0 0.0
  %334 = vmatprep.subr.mxu0 0.0
  %335 = vmatpush1.msra.mxu0 0.0
  %336 = vmatprep.subr.mxu0 0.0
  %337 = vmatpush1.msra.mxu0 0.0
  %338 = vmatprep.subr.mxu0 0.0
  %339 = vmatpush1.msra.mxu0 0.0
  %340 = vmatprep.subr.mxu0 0.0
  %341 = vmatpush1.msra.mxu0 0.0
  %342 = vmatprep.subr.mxu0 0.0
  %343 = vmatpush1.msra.mxu0 0.0
  %344 = vmatprep.subr.mxu0 0.0
  %345 = vmatpush1.msra.mxu0 0.0
  %346 = vmatprep.subr.mxu0 0.0
  %347 = vmatpush1.msra.mxu0 0.0
  %348 = vmatprep.subr.mxu0 0.0
  %349 = vmatpush1.msra.mxu0 0.0
  %350 = vmatprep.subr.mxu0 0.0
  %351 = vmatpush1.msra.mxu0 0.0
  %352 = vmatprep.subr.mxu0 0.0
  %353 = vmatpush1.msra.mxu0 0.0
  %354 = vmatprep.subr.mxu0 0.0
  %355 = vmatpush1.msra.mxu0 0.0
  %356 = vmatprep.subr.mxu0 %v191
  %357 = vmatpush1.msra.mxu0 %v190
  %358 = vmatprep.subr.mxu0 0.0
  %359 = vmatpush2.msra.mxu0 0.0
  %360 = vmatprep.subr.mxu0 0.0
  %361 = vmatpush2.msra.mxu0 0.0
  %362 = vmatprep.subr.mxu0 0.0
  %363 = vmatpush2.msra.mxu0 0.0
  %364 = vmatprep.subr.mxu0 0.0
  %365 = vmatpush2.msra.mxu0 0.0
  %366 = vmatprep.subr.mxu0 0.0
  %367 = vmatpush2.msra.mxu0 0.0
  %368 = vmatprep.subr.mxu0 0.0
  %369 = vmatpush2.msra.mxu0 0.0
  %370 = vmatprep.subr.mxu0 0.0
  %371 = vmatpush2.msra.mxu0 0.0
  %372 = vmatprep.subr.mxu0 0.0
  %373 = vmatpush2.msra.mxu0 0.0
  %374 = vmatprep.subr.mxu0 0.0
  %375 = vmatpush2.msra.mxu0 0.0
  %376 = vmatprep.subr.mxu0 0.0
  %377 = vmatpush2.msra.mxu0 0.0
  %378 = vmatprep.subr.mxu0 0.0
  %379 = vmatpush2.msra.mxu0 0.0
  %380 = vmatprep.subr.mxu0 0.0
  %381 = vmatpush2.msra.mxu0 0.0
  %382 = vmatprep.subr.mxu0 0.0
  %383 = vmatpush2.msra.mxu0 0.0
  %384 = vmatprep.subr.mxu0 0.0
  %385 = vmatpush2.msra.mxu0 0.0
  %386 = vmatprep.subr.mxu0 0.0
  %387 = vmatpush2.msra.mxu0 0.0
  %388 = vmatprep.subr.mxu0 0.0
  %389 = vmatpush2.msra.mxu0 0.0
  %390 = vmatprep.mubr.f32.mxu0 0.0
  %391 = vmatmul.mubr.f32.gmra.mxu0 %v226
  %v392 = vpop.f32.mrf.mxu0
  %v393 = vadd.f32 0.0, %v392
  %v394 = vpop.f32.mrf.mxu0
  %v395 = vadd.f32 0.0, %v394
  %396 = vmatprep.mubr.f32.mxu0 0.0
  %397 = vmatmul.mubr.f32.gmra.mxu0 %v229
  %v398 = vpop.f32.mrf.mxu0
  %v399 = vadd.f32 0.0, %v398
  %v400 = vpop.f32.mrf.mxu0
  %v401 = vadd.f32 0.0, %v400
  %402 = vmatprep.mubr.f32.mxu0 0.0
  %403 = vmatmul.mubr.f32.gmra.mxu0 %v232
  %v404 = vpop.f32.mrf.mxu0
  %v405 = vadd.f32 0.0, %v404
  %v406 = vpop.f32.mrf.mxu0
  %v407 = vadd.f32 0.0, %v406
  %408 = vmatprep.mubr.f32.mxu0 0.0
  %409 = vmatmul.mubr.f32.gmra.mxu0 %v235
  %v410 = vpop.f32.mrf.mxu0
  %v411 = vadd.f32 0.0, %v410
  %v412 = vpop.f32.mrf.mxu0
  %v413 = vadd.f32 0.0, %v412
  %414 = vdwg.mxu0
  %415 = vst [vmem:[%s3] sm:$0xff] %v304
  %416 = vst [vmem:[%s3 + $0x8] sm:$0xff] %v306
  %417 = vst [vmem:[%s3 + $0x10] sm:$0xff] %v393
  %418 = vst [vmem:[%s3 + $0x18] sm:$0xff] %v395
  %419 = vst [vmem:[%s3 + $0x20] sm:$0xff] %v310
  %420 = vst [vmem:[%s3 + $0x28] sm:$0xff] %v312
  %421 = vst [vmem:[%s3 + $0x30] sm:$0xff] %v399
  %422 = vst [vmem:[%s3 + $0x38] sm:$0xff] %v401
  %423 = vst [vmem:[%s3 + $0x40] sm:$0xff] %v316
  %424 = vst [vmem:[%s3 + $0x48] sm:$0xff] %v318
  %425 = vst [vmem:[%s3 + $0x50] sm:$0xff] %v405
  %426 = vst [vmem:[%s3 + $0x58] sm:$0xff] %v407
  %427 = vst [vmem:[%s3 + $0x60] sm:$0xff] %v322
  %428 = vst [vmem:[%s3 + $0x68] sm:$0xff] %v324
  %429 = vst [vmem:[%s3 + $0x70] sm:$0xff] %v411
  %430 = vst [vmem:[%s3 + $0x78] sm:$0xff] %v413
  // Predicated region
  $region14: #{weight_pool_forward.1} parent=0 // pred_check
    _
  $region15: #{weight_pool_forward.1} parent=0 // pred_check_branch
    %432 = sbr.rel (0) target = $region17
  $region16: #{weight_pool_forward.1} parent=0 // pred_region
    _
  $region17: #{weight_pool_forward.1} parent=0 // pred_fallthru
    _
  // Predicated region
  $region18: #{weight_pool_forward.1} parent=0 // pred_check
    _
  $region19: #{weight_pool_forward.1} parent=0 // pred_check_branch
    %434 = sbr.rel (0) target = $region21
  $region20: #{weight_pool_forward.1} parent=0 // pred_region
    _
  $region21: #{weight_pool_forward.1} parent=0 // pred_fallthru
    _

</llo_original>
